<compile_context>
chip_gen: v7x
topology: tpu7x:2x2x1
jax: 0.10.0
libtpu: 0.0.40
codegen_flags: <defaults>
</compile_context>

<pallas_src>
import functools

import jax
import jax.numpy as jnp
from jax import lax
from jax.experimental import pallas as pl
from jax.experimental.pallas import tpu as pltpu


def _round_up(x, m):
    return ((x + m - 1) // m) * m


def _vmem_budget_bytes():
    """Generation-aware usable-VMEM cap (leave headroom for compiler scratch)."""
    try:
        cap = int(pltpu.get_tpu_info().vmem_capacity_bytes)
    except Exception:
        cap = 64 << 20  # conservative default (v7x per-TC size)
    # ~75% of physical, capped at 100 MiB:  ~96 MiB on v5e/v6e (128 MiB), ~48 MiB on v7x.
    return min((cap * 3) // 4, 100 << 20)


# --------------------------------------------------------------------------------------
# Kernel
# --------------------------------------------------------------------------------------
def _transweigh_kernel(word_ref, tt_ref, tb_ref, ct_ref, cb_ref, out_ref, *, normalize):
    """One batch tile; weights are VMEM-resident (constant index_map).

    word_ref : (TILE_B, 2D)     concat([w1, w2]) in compute dtype
    tt_ref   : (2D, H_pad)      fused transformation tensor, compute dtype
    tb_ref   : (1, H_pad)       flattened transformation bias, f32
    ct_ref   : (H_pad, D_pad)   stacked combining tensor, compute dtype
    cb_ref   : (1, D_pad)       combining bias, f32
    out_ref  : (TILE_B, D_pad)  composed phrase (padded lanes are zero)
    """
    # Single first-layer matmul over K = 2*D (all T transformations fused lane-wise).
    h = jnp.dot(word_ref[...], tt_ref[...], preferred_element_type=jnp.float32)
    h = jnp.tanh(h + tb_ref[...])                               # f32, (TILE_B, H_pad)
    # TODO(synk): training-mode dropout not implemented; eval mode => identity.

    composed = jnp.dot(h.astype(ct_ref.dtype), ct_ref[...],
                       preferred_element_type=jnp.float32)
    composed = composed + cb_ref[...]                           # f32, (TILE_B, D_pad)

    if normalize:
        # F.normalize(x, p=2, dim=1) == x * rsqrt(max(sum(x*x), eps^2)), eps = 1e-12.
        # Padded lanes are exactly zero and do not perturb the norm.
        sumsq = jnp.sum(composed * composed, axis=1, keepdims=True)
        composed = composed * lax.rsqrt(jnp.maximum(sumsq, 1e-24))

    out_ref[...] = composed.astype(out_ref.dtype)


# --------------------------------------------------------------------------------------
# Parameter preparation (hoisted out of the per-call hot path; do once and cache)
# --------------------------------------------------------------------------------------
class TransweighParams:
    def __init__(self, tt, tb, ct, cb, D, H_pad, D_pad, compute_dtype):
        self.tt, self.tb, self.ct, self.cb = tt, tb, ct, cb
        self.D, self.H_pad, self.D_pad = D, H_pad, D_pad
        self.compute_dtype = compute_dtype


def prepare_transweigh_params(transformation_tensor, transformation_bias,
                              combining_tensor, combining_bias,
                              *, compute_dtype=jnp.float32):
    """Re-layout weights for the kernel: (T, 2D, D) -> one lane-dense (2D, T*D) block,
    (T, D, D) -> (T*D, D); zero-pad to multiples of 128 lanes (mathematically inert)."""
    T, twoD, D = transformation_tensor.shape
    assert twoD == 2 * D
    assert transformation_bias.shape == (T, D)
    assert combining_tensor.shape == (T, D, D)
    assert combining_bias.shape == (D,)

    H = T * D
    H_pad = _round_up(H, 128)
    D_pad = _round_up(D, 128)

    tt_flat = jnp.transpose(transformation_tensor, (1, 0, 2)).reshape(2 * D, H)
    tt = jnp.pad(tt_flat, ((0, 0), (0, H_pad - H))).astype(compute_dtype)
    tb = jnp.pad(transformation_bias.reshape(1, H).astype(jnp.float32),
                 ((0, 0), (0, H_pad - H)))
    ct = jnp.pad(combining_tensor.reshape(H, D),
                 ((0, H_pad - H), (0, D_pad - D))).astype(compute_dtype)
    cb = jnp.pad(combining_bias.reshape(1, D).astype(jnp.float32),
                 ((0, 0), (0, D_pad - D)))
    return TransweighParams(tt, tb, ct, cb, D, H_pad, D_pad, jnp.dtype(compute_dtype))


# --------------------------------------------------------------------------------------
# Forward (hot path)
# --------------------------------------------------------------------------------------
def transweigh_apply(params, w1, w2, *, normalize_embeddings=True, tile_b=None,
                     out_dtype=None, return_padded=False, single_buffer_weights=True):
    B, D = w1.shape
    assert D == params.D and w2.shape == (B, D)
    H_pad, D_pad = params.H_pad, params.D_pad
    cdt = params.compute_dtype
    out_dtype = jnp.dtype(out_dtype) if out_dtype is not None else jnp.dtype(w1.dtype)

    # Concat fused with the compute-dtype cast: single (B, 2D) LHS stream, one HBM pass.
    word = jnp.concatenate([w1, w2], axis=1).astype(cdt)

    itemsize = jnp.dtype(cdt).itemsize
    out_itemsize = jnp.dtype(out_dtype).itemsize
    weight_bytes = (2 * D * H_pad + H_pad * D_pad) * itemsize + (H_pad + D_pad) * 4

    def _act_bytes(tb_):
        io = 2 * tb_ * 2 * D * itemsize + 2 * tb_ * D_pad * out_itemsize  # pipelined I/O
        interm = tb_ * (H_pad + D_pad) * 4                                # f32 h + composed
        return io + interm

    vmem_budget = _vmem_budget_bytes()

    if tile_b is None:
        if B <= 64:
            tile_b = B
        else:
            # Big tiles amortize the ~0.35 us per-grid-step overhead; keep >= 2 grid
            # steps so a dual-TensorCore chip (v7x) can split the "parallel" batch axis.
            tile_b = min(_round_up(pl.cdiv(B, 2), 32), 1024)
        # Shrink (keeping 32-alignment, safe for bf16 sublane packing) if weights
        # (worst case double-buffered) + activations would blow the VMEM budget.
        while tile_b > 32 and 2 * weight_bytes + _act_bytes(tile_b) > (2 * vmem_budget) // 3:
            tile_b = max(32, _round_up(tile_b // 2, 32))
    # Block validity: tile_b == B (full-dim block), or a multiple of 8 (partial last
    # block is allowed; see invariant note at the top of the file).
    assert tile_b == B or tile_b % 8 == 0

    grid = (pl.cdiv(B, tile_b),)
    vmem_limit = int(min(max(2 * weight_bytes + _act_bytes(tile_b) + (4 << 20), 16 << 20),
                         vmem_budget))

    cost = pl.CostEstimate(
        flops=2 * B * 2 * D * H_pad + 2 * B * H_pad * D_pad,
        transcendentals=B * H_pad + B,
        bytes_accessed=weight_bytes + B * 2 * D * itemsize + B * D_pad * out_itemsize,
    )

    kernel = functools.partial(_transweigh_kernel, normalize=normalize_embeddings)

    def _call(resident_single_buffered):
        # Resident weights/biases have a constant index_map; single-buffer them to halve
        # their VMEM footprint (important under v7x's 64 MiB/TC).
        resident_kw = ({"pipeline_mode": pl.Buffered(1)}
                       if resident_single_buffered else {})
        return pl.pallas_call(
            kernel,
            out_shape=jax.ShapeDtypeStruct((B, D_pad), out_dtype),
            grid=grid,
            in_specs=[
                pl.BlockSpec((tile_b, 2 * D), lambda i: (i, 0)),                 # word
                pl.BlockSpec((2 * D, H_pad), lambda i: (0, 0), **resident_kw),   # TT fused
                pl.BlockSpec((1, H_pad), lambda i: (0, 0), **resident_kw),       # T bias
                pl.BlockSpec((H_pad, D_pad), lambda i: (0, 0), **resident_kw),   # CT stacked
                pl.BlockSpec((1, D_pad), lambda i: (0, 0), **resident_kw),       # C bias
            ],
            out_specs=pl.BlockSpec((tile_b, D_pad), lambda i: (i, 0)),
            compiler_params=pltpu.CompilerParams(
                dimension_semantics=("parallel",),
                vmem_limit_bytes=vmem_limit),
            cost_estimate=cost,
        )(word, params.tt, params.tb, params.ct, params.cb)

    if single_buffer_weights:
        try:
            out_padded = _call(True)
        except Exception:
            # pipeline_mode=pl.Buffered(1) not supported by this jax/libtpu combination:
            # fall back to default double-buffering (correctness unaffected).
            out_padded = _call(False)
    else:
        out_padded = _call(False)

    if return_padded:
        return out_padded          # lane-dense (B, D_pad); padded lanes are zero
    return out_padded[:, :D]


def transweigh_pretrain_forward(w1, w2, transformation_tensor, transformation_bias,
                                combining_tensor, combining_bias, *,
                                normalize_embeddings=True, compute_dtype=None,
                                tile_b=None, out_dtype=None):
    """Convenience wrapper (prep + apply). For repeated calls with the same parameters,
    call prepare_transweigh_params() once and reuse transweigh_apply()."""
    if compute_dtype is None:
        compute_dtype = w1.dtype   # reduced precision is an explicit opt-in
    params = prepare_transweigh_params(transformation_tensor, transformation_bias,
                                       combining_tensor, combining_bias,
                                       compute_dtype=compute_dtype)
    return transweigh_apply(params, w1, w2, normalize_embeddings=normalize_embeddings,
                            tile_b=tile_b, out_dtype=out_dtype)


# --------------------------------------------------------------------------------------
# Reference + tests
# --------------------------------------------------------------------------------------
def _reference(w1, w2, tt, tb, ct, cb, normalize):
    word = jnp.concatenate([w1, w2], axis=1)
    transformed = jnp.einsum('bi,tir->btr', word, tt) + tb
    transformed = jnp.tanh(transformed)
    composed = jnp.einsum('btr,trj->bj', transformed, ct) + cb
    if normalize:
        norm = jnp.maximum(jnp.linalg.norm(composed, axis=1, keepdims=True), 1e-12)
        composed = composed / norm
    return composed


if __name__ == "__main__":
    # Small shapes consistent with the module: batch=2, input_dim=32, transformations=4.
    B, D, T = 2, 32, 4
    normalize_embeddings = True

    key = jax.random.PRNGKey(0)
    k1, k2, k3, k4, k5, k6 = jax.random.split(key, 6)

    w1 = jax.random.normal(k1, (B, D), dtype=jnp.float32)
    w2 = jax.random.normal(k2, (B, D), dtype=jnp.float32)

    # Deterministic synthetic parameter init (mirrors xavier_normal_ / uniform_ shapes).
    fan_in, fan_out = 2 * D * D, T * D
    std_tt = (2.0 / (fan_in + fan_out)) ** 0.5
    transformation_tensor = std_tt * jax.random.normal(k3, (T, 2 * D, D), dtype=jnp.float32)
    transformation_bias = jax.random.uniform(k4, (T, D), dtype=jnp.float32)
    fan_in_c, fan_out_c = D * D, T * D
    std_ct = (2.0 / (fan_in_c + fan_out_c)) ** 0.5
    combining_tensor = std_ct * jax.random.normal(k5, (T, D, D), dtype=jnp.float32)
    combining_bias = jax.random.uniform(k6, (D,), dtype=jnp.float32)

    ref = _reference(w1, w2, transformation_tensor, transformation_bias,
                     combining_tensor, combining_bias, normalize_embeddings)

    # 1) Default path: compute dtype follows the input (f32) — tight tolerance.
    out_f32 = transweigh_pretrain_forward(
        w1, w2, transformation_tensor, transformation_bias,
        combining_tensor, combining_bias,
        normalize_embeddings=normalize_embeddings)
    out_f32 = jax.block_until_ready(out_f32)
    assert out_f32.shape == (B, D)
    assert jnp.allclose(out_f32, ref, atol=1e-5, rtol=1e-5), "f32 path mismatch vs JAX reference"

    # 2) bf16 MXU path (explicit opt-in); weights prepared ONCE and reused (hoisted layout).
    params_bf16 = prepare_transweigh_params(
        transformation_tensor, transformation_bias, combining_tensor, combining_bias,
        compute_dtype=jnp.bfloat16)
    out_bf16 = transweigh_apply(params_bf16, w1, w2,
                                normalize_embeddings=normalize_embeddings)
    out_bf16 = jax.block_until_ready(out_bf16)
    assert out_bf16.shape == (B, D)
    assert jnp.allclose(out_bf16, ref, atol=5e-2, rtol=5e-2), "bf16 path mismatch vs JAX reference"

    # 3) Larger batch: exercises auto tile selection (>= 2 grid steps) with reused params.
    Bk = 384
    kb1, kb2 = jax.random.split(jax.random.PRNGKey(1), 2)
    w1b = jax.random.normal(kb1, (Bk, D), dtype=jnp.float32)
    w2b = jax.random.normal(kb2, (Bk, D), dtype=jnp.float32)
    refb = _reference(w1b, w2b, transformation_tensor, transformation_bias,
                      combining_tensor, combining_bias, normalize_embeddings)
    outb = transweigh_apply(params_bf16, w1b, w2b,
                            normalize_embeddings=normalize_embeddings)
    outb = jax.block_until_ready(outb)
    assert outb.shape == (Bk, D)
    assert jnp.allclose(outb, refb, atol=5e-2, rtol=5e-2), "tiled bf16 path mismatch"

    # 4) Explicit tile_b with a partial last block (B=384, tile_b=256 -> blocks 256 + 128).
    outc = transweigh_apply(params_bf16, w1b, w2b,
                            normalize_embeddings=normalize_embeddings, tile_b=256)
    outc = jax.block_until_ready(outc)
    assert jnp.allclose(outc, refb, atol=5e-2, rtol=5e-2), "partial-block path mismatch"

    print("KERNEL_OK")
</pallas_src>

<mosaic_0001>
module attributes {stable_mosaic.version = 11 : i64} {
  func.func @_transweigh_kernel(%arg0: i32, %arg1: memref<2x64xf32, #tpu.memory_space<vmem>>, %arg2: memref<64x128xf32, #tpu.memory_space<vmem>>, %arg3: memref<1x128xf32, #tpu.memory_space<vmem>>, %arg4: memref<128x128xf32, #tpu.memory_space<vmem>>, %arg5: memref<1x128xf32, #tpu.memory_space<vmem>>, %arg6: memref<2x128xf32, #tpu.memory_space<vmem>>) attributes {dimension_semantics = [#tpu.dimension_semantics<parallel>], iteration_bounds = array<i64: 1>, scalar_prefetch = 0 : i64, scratch_operands = 0 : i64, tpu.core_type = #tpu.core_type<tc>, window_params = [{transform_indices = @transform_0, window_bounds = array<i64: 2, 64>}, {pipeline_mode = #tpu.pipeline_mode<synchronous>, transform_indices = @transform_1, window_bounds = array<i64: 64, 128>}, {pipeline_mode = #tpu.pipeline_mode<synchronous>, transform_indices = @transform_2, window_bounds = array<i64: 1, 128>}, {pipeline_mode = #tpu.pipeline_mode<synchronous>, transform_indices = @transform_3, window_bounds = array<i64: 128, 128>}, {pipeline_mode = #tpu.pipeline_mode<synchronous>, transform_indices = @transform_4, window_bounds = array<i64: 1, 128>}, {transform_indices = @transform_5, window_bounds = array<i64: 2, 128>}]} {
    %c0 = arith.constant 0 : index
    %c0_0 = arith.constant 0 : index
    %0 = vector.load %arg1[%c0, %c0_0] : memref<2x64xf32, #tpu.memory_space<vmem>>, vector<2x64xf32>
    %c0_1 = arith.constant 0 : index
    %c0_2 = arith.constant 0 : index
    %1 = vector.load %arg2[%c0_1, %c0_2] : memref<64x128xf32, #tpu.memory_space<vmem>>, vector<64x128xf32>
    %cst = arith.constant dense<0.000000e+00> : vector<2x128xf32>
    %2 = tpu.matmul %0, %1, %cst {dimension_numbers = #tpu.dot_dimension_numbers<[1], [0], [0], [1], [0, 0, 1, 1], [], []>} : vector<2x64xf32>, vector<64x128xf32>, vector<2x128xf32> -> vector<2x128xf32>
    %c0_3 = arith.constant 0 : index
    %c0_4 = arith.constant 0 : index
    %3 = vector.load %arg3[%c0_3, %c0_4] : memref<1x128xf32, #tpu.memory_space<vmem>>, vector<1x128xf32>
    %4 = vector.broadcast %3 : vector<1x128xf32> to vector<2x128xf32>
    %5 = arith.addf %2, %4 : vector<2x128xf32>
    %6 = math.tanh %5 : vector<2x128xf32>
    %c0_5 = arith.constant 0 : index
    %c0_6 = arith.constant 0 : index
    %7 = vector.load %arg4[%c0_5, %c0_6] : memref<128x128xf32, #tpu.memory_space<vmem>>, vector<128x128xf32>
    %cst_7 = arith.constant dense<0.000000e+00> : vector<2x128xf32>
    %8 = tpu.matmul %6, %7, %cst_7 {dimension_numbers = #tpu.dot_dimension_numbers<[1], [0], [0], [1], [0, 0, 1, 1], [], []>} : vector<2x128xf32>, vector<128x128xf32>, vector<2x128xf32> -> vector<2x128xf32>
    %c0_8 = arith.constant 0 : index
    %c0_9 = arith.constant 0 : index
    %9 = vector.load %arg5[%c0_8, %c0_9] : memref<1x128xf32, #tpu.memory_space<vmem>>, vector<1x128xf32>
    %10 = vector.broadcast %9 : vector<1x128xf32> to vector<2x128xf32>
    %11 = arith.addf %8, %10 : vector<2x128xf32>
    %12 = arith.mulf %11, %11 : vector<2x128xf32>
    %cst_10 = arith.constant dense<0.000000e+00> : vector<2xf32>
    %13 = vector.multi_reduction <add>, %12, %cst_10 [1] : vector<2x128xf32> to vector<2xf32>
    %14 = vector.shape_cast %13 : vector<2xf32> to vector<2x1xf32>
    %cst_11 = arith.constant 1.000000e-24 : f32
    %15 = vector.broadcast %cst_11 : f32 to vector<2x1xf32>
    %16 = arith.maximumf %14, %15 : vector<2x1xf32>
    %17 = math.rsqrt %16 : vector<2x1xf32>
    %18 = vector.broadcast %17 : vector<2x1xf32> to vector<2x128xf32>
    %19 = arith.mulf %11, %18 : vector<2x128xf32>
    %c0_12 = arith.constant 0 : index
    %c0_13 = arith.constant 0 : index
    %20 = vector.load %arg6[%c0_12, %c0_13] : memref<2x128xf32, #tpu.memory_space<vmem>>, vector<2x128xf32>
    tpu.vector_store %arg6[%c0_12, %c0_13], %19 {strides = array<i32>} : memref<2x128xf32, #tpu.memory_space<vmem>>, vector<2x128xf32>,
    return
  }
  func.func @transform_0(%arg0: i32) -> (i32, i32) {
    %c0_i32 = arith.constant 0 : i32
    %c0_i32_0 = arith.constant 0 : i32
    return %arg0, %c0_i32 : i32, i32
  }
  func.func @transform_1(%arg0: i32) -> (i32, i32) {
    %c0_i32 = arith.constant 0 : i32
    %c0_i32_0 = arith.constant 0 : i32
    %c0_i32_1 = arith.constant 0 : i32
    return %c0_i32, %c0_i32_0 : i32, i32
  }
  func.func @transform_2(%arg0: i32) -> (i32, i32) {
    %c0_i32 = arith.constant 0 : i32
    %c0_i32_0 = arith.constant 0 : i32
    %c0_i32_1 = arith.constant 0 : i32
    return %c0_i32, %c0_i32_0 : i32, i32
  }
  func.func @transform_3(%arg0: i32) -> (i32, i32) {
    %c0_i32 = arith.constant 0 : i32
    %c0_i32_0 = arith.constant 0 : i32
    %c0_i32_1 = arith.constant 0 : i32
    return %c0_i32, %c0_i32_0 : i32, i32
  }
  func.func @transform_4(%arg0: i32) -> (i32, i32) {
    %c0_i32 = arith.constant 0 : i32
    %c0_i32_0 = arith.constant 0 : i32
    %c0_i32_1 = arith.constant 0 : i32
    return %c0_i32, %c0_i32_0 : i32, i32
  }
  func.func @transform_5(%arg0: i32) -> (i32, i32) {
    %c0_i32 = arith.constant 0 : i32
    %c0_i32_0 = arith.constant 0 : i32
    return %arg0, %c0_i32 : i32, i32
  }
}

module attributes {stable_mosaic.version = 11 : i64} {
  func.func @_transweigh_kernel(%arg0: i32, %arg1: memref<2x64xf32, #tpu.memory_space<vmem>>, %arg2: memref<64x128xf32, #tpu.memory_space<vmem>>, %arg3: memref<1x128xf32, #tpu.memory_space<vmem>>, %arg4: memref<128x128xf32, #tpu.memory_space<vmem>>, %arg5: memref<1x128xf32, #tpu.memory_space<vmem>>, %arg6: memref<2x128xf32, #tpu.memory_space<vmem>>) attributes {dimension_semantics = [#tpu.dimension_semantics<parallel>], iteration_bounds = array<i64: 1>, scalar_prefetch = 0 : i64, scratch_operands = 0 : i64, tpu.core_type = #tpu.core_type<tc>, window_params = [{transform_indices = @transform_0, window_bounds = array<i64: 2, 64>}, {pipeline_mode = #tpu.pipeline_mode<synchronous>, transform_indices = @transform_1, window_bounds = array<i64: 64, 128>}, {pipeline_mode = #tpu.pipeline_mode<synchronous>, transform_indices = @transform_2, window_bounds = array<i64: 1, 128>}, {pipeline_mode = #tpu.pipeline_mode<synchronous>, transform_indices = @transform_3, window_bounds = array<i64: 128, 128>}, {pipeline_mode = #tpu.pipeline_mode<synchronous>, transform_indices = @transform_4, window_bounds = array<i64: 1, 128>}, {transform_indices = @transform_5, window_bounds = array<i64: 2, 128>}]} {
    %c0 = arith.constant 0 : index
    %c0_0 = arith.constant 0 : index
    %0 = vector.load %arg1[%c0, %c0_0] : memref<2x64xf32, #tpu.memory_space<vmem>>, vector<2x64xf32>
    %c0_1 = arith.constant 0 : index
    %c0_2 = arith.constant 0 : index
    %1 = vector.load %arg2[%c0_1, %c0_2] : memref<64x128xf32, #tpu.memory_space<vmem>>, vector<64x128xf32>
    %cst = arith.constant dense<0.000000e+00> : vector<2x128xf32>
    %2 = tpu.matmul %0, %1, %cst {dimension_numbers = #tpu.dot_dimension_numbers<[1], [0], [0], [1], [0, 0, 1, 1], [], []>} : vector<2x64xf32>, vector<64x128xf32>, vector<2x128xf32> -> vector<2x128xf32>
    %c0_3 = arith.constant 0 : index
    %c0_4 = arith.constant 0 : index
    %3 = vector.load %arg3[%c0_3, %c0_4] : memref<1x128xf32, #tpu.memory_space<vmem>>, vector<1x128xf32>
    %4 = vector.broadcast %3 : vector<1x128xf32> to vector<2x128xf32>
    %5 = arith.addf %2, %4 : vector<2x128xf32>
    %6 = math.tanh %5 : vector<2x128xf32>
    %c0_5 = arith.constant 0 : index
    %c0_6 = arith.constant 0 : index
    %7 = vector.load %arg4[%c0_5, %c0_6] : memref<128x128xf32, #tpu.memory_space<vmem>>, vector<128x128xf32>
    %cst_7 = arith.constant dense<0.000000e+00> : vector<2x128xf32>
    %8 = tpu.matmul %6, %7, %cst_7 {dimension_numbers = #tpu.dot_dimension_numbers<[1], [0], [0], [1], [0, 0, 1, 1], [], []>} : vector<2x128xf32>, vector<128x128xf32>, vector<2x128xf32> -> vector<2x128xf32>
    %c0_8 = arith.constant 0 : index
    %c0_9 = arith.constant 0 : index
    %9 = vector.load %arg5[%c0_8, %c0_9] : memref<1x128xf32, #tpu.memory_space<vmem>>, vector<1x128xf32>
    %10 = vector.broadcast %9 : vector<1x128xf32> to vector<2x128xf32>
    %11 = arith.addf %8, %10 : vector<2x128xf32>
    %12 = arith.mulf %11, %11 : vector<2x128xf32>
    %cst_10 = arith.constant dense<0.000000e+00> : vector<2xf32>
    %13 = vector.multi_reduction <add>, %12, %cst_10 [1] : vector<2x128xf32> to vector<2xf32>
    %14 = vector.shape_cast %13 : vector<2xf32> to vector<2x1xf32>
    %cst_11 = arith.constant 1.000000e-24 : f32
    %15 = vector.broadcast %cst_11 : f32 to vector<2x1xf32>
    %16 = arith.maximumf %14, %15 : vector<2x1xf32>
    %17 = math.rsqrt %16 : vector<2x1xf32>
    %18 = vector.broadcast %17 : vector<2x1xf32> to vector<2x128xf32>
    %19 = arith.mulf %11, %18 : vector<2x128xf32>
    %c0_12 = arith.constant 0 : index
    %c0_13 = arith.constant 0 : index
    %20 = vector.load %arg6[%c0_12, %c0_13] : memref<2x128xf32, #tpu.memory_space<vmem>>, vector<2x128xf32>
    tpu.vector_store %arg6[%c0_12, %c0_13], %19 {strides = array<i32>} : memref<2x128xf32, #tpu.memory_space<vmem>>, vector<2x128xf32>,
    return
  }
  func.func @transform_0(%arg0: i32) -> (i32, i32) {
    %c0_i32 = arith.constant 0 : i32
    %c0_i32_0 = arith.constant 0 : i32
    return %arg0, %c0_i32 : i32, i32
  }
  func.func @transform_1(%arg0: i32) -> (i32, i32) {
    %c0_i32 = arith.constant 0 : i32
    %c0_i32_0 = arith.constant 0 : i32
    %c0_i32_1 = arith.constant 0 : i32
    return %c0_i32, %c0_i32_0 : i32, i32
  }
  func.func @transform_2(%arg0: i32) -> (i32, i32) {
    %c0_i32 = arith.constant 0 : i32
    %c0_i32_0 = arith.constant 0 : i32
    %c0_i32_1 = arith.constant 0 : i32
    return %c0_i32, %c0_i32_0 : i32, i32
  }
  func.func @transform_3(%arg0: i32) -> (i32, i32) {
    %c0_i32 = arith.constant 0 : i32
    %c0_i32_0 = arith.constant 0 : i32
    %c0_i32_1 = arith.constant 0 : i32
    return %c0_i32, %c0_i32_0 : i32, i32
  }
  func.func @transform_4(%arg0: i32) -> (i32, i32) {
    %c0_i32 = arith.constant 0 : i32
    %c0_i32_0 = arith.constant 0 : i32
    %c0_i32_1 = arith.constant 0 : i32
    return %c0_i32, %c0_i32_0 : i32, i32
  }
  func.func @transform_5(%arg0: i32) -> (i32, i32) {
    %c0_i32 = arith.constant 0 : i32
    %c0_i32_0 = arith.constant 0 : i32
    return %arg0, %c0_i32 : i32, i32
  }
}

</mosaic_0001>

<llo_original>
// kernel: tpu_custom_call.1
$region0: #{tpu_custom_call.1}
  #allocation0 [shape = 'u32[]', space=smem, size = 0x4, offset = 0x4, fixed_abs, tag = 'smem constant byte address 0x4 - core index']
  #allocation1 [shape = 'u32[144,128]{1,0:T(1,128)}', space=vmem, size = 0x12000, scoped, tag = 'internal scratch']
  %s0 = inlined_call_operand.hbm [shape: f32[2,64], index: 0, kind: input, shape index: {}]
  %s1 = inlined_call_operand.hbm [shape: f32[64,128], index: 1, kind: input, shape index: {}]
  %s2 = inlined_call_operand.vmem [shape: f32[1,128], index: 2, kind: input, shape index: {}]
  %s3 = inlined_call_operand.hbm [shape: f32[128,128], index: 3, kind: input, shape index: {}]
  %s4 = inlined_call_operand.vmem [shape: f32[1,128], index: 4, kind: input, shape index: {}]
  %s5 = inlined_call_operand.hbm [shape: f32[2,128], index: 5, kind: output, shape index: {}]
  %s6 = sld [smem:[#allocation0]]
  $region42: #{tpu_custom_call.1} parent=0
    _
  %s8 = ssub.s32 1, %s6
  %s9 = scalar_select 0, %s8, %s6
  $region1: #{tpu_custom_call.1} parent=0
    #allocation2 [shape = 'u8[1024]{0}', space=vmem, size = 0x400, scoped, tag = 'input window, operand 0, single buffered']
    #allocation3 [shape = 's32[1]{0}', space=sflag, size = 0x4, scoped, tag = 'scoped memory for tpu_custom_call.1']
    #allocation4 [shape = 's32[1]{0}', space=sflag, size = 0x4, scoped, tag = 'scoped memory for tpu_custom_call.1']
    #allocation5 [shape = 'u8[32768]{0}', space=vmem, size = 0x8000, scoped, tag = 'input window, operand 1, single buffered']
    #allocation6 [shape = 's32[1]{0}', space=sflag, size = 0x4, scoped, tag = 'scoped memory for tpu_custom_call.1']
    #allocation7 [shape = 'u8[65536]{0}', space=vmem, size = 0x10000, scoped, tag = 'input window, operand 3, single buffered']
    #allocation8 [shape = 'u8[1024]{0}', space=vmem, size = 0x400, scoped, tag = 'output window, operand 0, single buffered']
    %10 = vsyncpa [#allocation3], 0
    %11 = vsyncpa [#allocation6], 0
    %12 = vsyncpa [#allocation4], 0
    // Predicated region
    $region2: #{tpu_custom_call.1} parent=1 // pred_check
      _
    $region3: #{tpu_custom_call.1} parent=1 // pred_check_branch
      %14 = sbr.rel (0) target = $region5
    $region4: #{tpu_custom_call.1} parent=1 // pred_region
      %s16 = ssub.s32 32, 32
      %17 = vsyncadd [#allocation3], %s16
      %s19 = sshll.u32 [#allocation2], 4
      %s20 = int_to_ptr.vmem [resolvable:$true] %s19
      %22 = dma.hbm_to_vmem [thread:$0]  %s0, 32, %s20, [#allocation3]
    $region5: #{tpu_custom_call.1} parent=1 // pred_fallthru
      _
    // Predicated region
    $region6: #{tpu_custom_call.1} parent=1 // pred_check
      _
    $region7: #{tpu_custom_call.1} parent=1 // pred_check_branch
      %24 = sbr.rel (0) target = $region9
    $region8: #{tpu_custom_call.1} parent=1 // pred_region
      %s26 = ssub.s32 1024, 1024
      %27 = vsyncadd [#allocation6], %s26
      %s28 = sshll.u32 [#allocation5], 4
      %s29 = int_to_ptr.vmem [resolvable:$true] %s28
      %34 = dma.hbm_to_vmem [thread:$0]  %s1, 1024, %s29, [#allocation6], 128, 128, 8
    $region9: #{tpu_custom_call.1} parent=1 // pred_fallthru
      _
    // Predicated region
    $region10: #{tpu_custom_call.1} parent=1 // pred_check
      _
    $region11: #{tpu_custom_call.1} parent=1 // pred_check_branch
      %36 = sbr.rel (0) target = $region13
    $region12: #{tpu_custom_call.1} parent=1 // pred_region
      _
    $region13: #{tpu_custom_call.1} parent=1 // pred_fallthru
      _
    // Predicated region
    $region14: #{tpu_custom_call.1} parent=1 // pred_check
      _
    $region15: #{tpu_custom_call.1} parent=1 // pred_check_branch
      %38 = sbr.rel (0) target = $region17
    $region16: #{tpu_custom_call.1} parent=1 // pred_region
      %s40 = ssub.s32 2048, 2048
      %41 = vsyncadd [#allocation6], %s40
      %s42 = sshll.u32 [#allocation7], 4
      %s43 = int_to_ptr.vmem [resolvable:$true] %s42
      %48 = dma.hbm_to_vmem [thread:$0]  %s3, 2048, %s43, [#allocation6], 128, 128, 8
    $region17: #{tpu_custom_call.1} parent=1 // pred_fallthru
      _
    // Predicated region
    $region18: #{tpu_custom_call.1} parent=1 // pred_check
      _
    $region19: #{tpu_custom_call.1} parent=1 // pred_check_branch
      %50 = sbr.rel (0) target = $region21
    $region20: #{tpu_custom_call.1} parent=1 // pred_region
      _
    $region21: #{tpu_custom_call.1} parent=1 // pred_fallthru
      _
    // Predicated region
    $region22: #{tpu_custom_call.1} parent=1 // pred_check
      _
    $region23: #{tpu_custom_call.1} parent=1 // pred_check_branch
      %52 = sbr.rel (0) target = $region25
    $region24: #{tpu_custom_call.1} parent=1 // pred_region
      %53 = dma.done [#allocation3], 32
    $region25: #{tpu_custom_call.1} parent=1 // pred_fallthru
      _
    // Predicated region
    $region26: #{tpu_custom_call.1} parent=1 // pred_check
      _
    $region27: #{tpu_custom_call.1} parent=1 // pred_check_branch
      %55 = sbr.rel (0) target = $region29
    $region28: #{tpu_custom_call.1} parent=1 // pred_region
      %56 = dma.done [#allocation6], 1024
    $region29: #{tpu_custom_call.1} parent=1 // pred_fallthru
      _
    // Predicated region
    $region30: #{tpu_custom_call.1} parent=1 // pred_check
      _
    $region31: #{tpu_custom_call.1} parent=1 // pred_check_branch
      %58 = sbr.rel (0) target = $region33
    $region32: #{tpu_custom_call.1} parent=1 // pred_region
      %59 = dma.done [#allocation6], 2048
    $region33: #{tpu_custom_call.1} parent=1 // pred_fallthru
      _
    %v60 = vld [vmem:[#allocation2] sm:$0x3]
    %v61 = vld [vmem:[#allocation5] sm:$0xff]
    %v62 = vld [vmem:[#allocation5 + $0x8] sm:$0xff]
    %v63 = vld [vmem:[#allocation5 + $0x10] sm:$0xff]
    %v64 = vld [vmem:[#allocation5 + $0x18] sm:$0xff]
    %v65 = vld [vmem:[#allocation5 + $0x20] sm:$0xff]
    %v66 = vld [vmem:[#allocation5 + $0x28] sm:$0xff]
    %v67 = vld [vmem:[#allocation5 + $0x30] sm:$0xff]
    %v68 = vld [vmem:[#allocation5 + $0x38] sm:$0xff]
    %v69 = vld [vmem:[%s2] sm:$0x1]
    %v71 = vlaneseq
    %v72 = vshrl.u32 %v71, 7
    %v73 = vsub.s32 0, %v72
    %v74 = vrot.slane %v69, %v73
    %vm76 = vcmask 523264
    %v78 = vsel %vm76, %v60, 0
    %80 = vmatprep.subr.mxu0 0.0
    %81 = vmatpush1.msra.mxu0 %v61
    %82 = vmatprep.subr.mxu0 0.0
    %83 = vmatpush1.msra.mxu0 %v62
    %84 = vmatprep.subr.mxu0 0.0
    %85 = vmatpush1.msra.mxu0 %v63
    %86 = vmatprep.subr.mxu0 0.0
    %87 = vmatpush1.msra.mxu0 %v64
    %88 = vmatprep.subr.mxu0 0.0
    %89 = vmatpush1.msra.mxu0 %v65
    %90 = vmatprep.subr.mxu0 0.0
    %91 = vmatpush1.msra.mxu0 %v66
    %92 = vmatprep.subr.mxu0 0.0
    %93 = vmatpush1.msra.mxu0 %v67
    %94 = vmatprep.subr.mxu0 0.0
    %95 = vmatpush1.msra.mxu0 %v68
    %96 = vmatprep.subr.mxu0 0.0
    %97 = vmatpush1.msra.mxu0 0.0
    %98 = vmatprep.subr.mxu0 0.0
    %99 = vmatpush1.msra.mxu0 0.0
    %100 = vmatprep.subr.mxu0 0.0
    %101 = vmatpush1.msra.mxu0 0.0
    %102 = vmatprep.subr.mxu0 0.0
    %103 = vmatpush1.msra.mxu0 0.0
    %104 = vmatprep.subr.mxu0 0.0
    %105 = vmatpush1.msra.mxu0 0.0
    %106 = vmatprep.subr.mxu0 0.0
    %107 = vmatpush1.msra.mxu0 0.0
    %108 = vmatprep.subr.mxu0 0.0
    %109 = vmatpush1.msra.mxu0 0.0
    %110 = vmatprep.subr.mxu0 0.0
    %111 = vmatpush1.msra.mxu0 0.0
    %112 = vmatprep.subr.mxu0 0.0
    %113 = vmatpush1.msra.mxu0 0.0
    %114 = vmatprep.subr.mxu0 0.0
    %115 = vmatpush1.msra.mxu0 0.0
    %116 = vmatprep.subr.mxu0 0.0
    %117 = vmatpush1.msra.mxu0 0.0
    %118 = vmatprep.subr.mxu0 0.0
    %119 = vmatpush1.msra.mxu0 0.0
    %120 = vmatprep.subr.mxu0 0.0
    %121 = vmatpush1.msra.mxu0 0.0
    %122 = vmatprep.subr.mxu0 0.0
    %123 = vmatpush1.msra.mxu0 0.0
    %124 = vmatprep.subr.mxu0 0.0
    %125 = vmatpush1.msra.mxu0 0.0
    %126 = vmatprep.subr.mxu0 0.0
    %127 = vmatpush1.msra.mxu0 0.0
    %128 = vmatprep.subr.mxu0 0.0
    %129 = vmatpush1.msra.mxu0 0.0
    %130 = vmatprep.subr.mxu0 0.0
    %131 = vmatpush1.msra.mxu0 0.0
    %132 = vmatprep.subr.mxu0 0.0
    %133 = vmatpush1.msra.mxu0 0.0
    %134 = vmatprep.subr.mxu0 0.0
    %135 = vmatpush1.msra.mxu0 0.0
    %136 = vmatprep.subr.mxu0 0.0
    %137 = vmatpush1.msra.mxu0 0.0
    %138 = vmatprep.subr.mxu0 0.0
    %139 = vmatpush1.msra.mxu0 0.0
    %140 = vmatprep.subr.mxu0 0.0
    %141 = vmatpush1.msra.mxu0 0.0
    %142 = vmatprep.subr.mxu0 0.0
    %143 = vmatpush1.msra.mxu0 0.0
    %144 = vmatprep.mubr.f32.mxu0 0.0
    %145 = vmatmul.mubr.f32.gmra.mrb[0].mxu0 %v78
    %v146 = vpop.f32.mrb[0].mxu0
    %v147 = vadd.f32 %v74, %v146
    %v148 = vpop.f32.mrb[0].mxu0
    %149 = vdwg.mxu0
    %v150 = vtanh.pop %v147
    %v151 = vld [vmem:[#allocation7] sm:$0xff]
    %v152 = vld [vmem:[#allocation7 + $0x8] sm:$0xff]
    %v153 = vld [vmem:[#allocation7 + $0x10] sm:$0xff]
    %v154 = vld [vmem:[#allocation7 + $0x18] sm:$0xff]
    %v155 = vld [vmem:[#allocation7 + $0x20] sm:$0xff]
    %v156 = vld [vmem:[#allocation7 + $0x28] sm:$0xff]
    %v157 = vld [vmem:[#allocation7 + $0x30] sm:$0xff]
    %v158 = vld [vmem:[#allocation7 + $0x38] sm:$0xff]
    %v159 = vld [vmem:[#allocation7 + $0x40] sm:$0xff]
    %v160 = vld [vmem:[#allocation7 + $0x48] sm:$0xff]
    %v161 = vld [vmem:[#allocation7 + $0x50] sm:$0xff]
    %v162 = vld [vmem:[#allocation7 + $0x58] sm:$0xff]
    %v163 = vld [vmem:[#allocation7 + $0x60] sm:$0xff]
    %v164 = vld [vmem:[#allocation7 + $0x68] sm:$0xff]
    %v165 = vld [vmem:[#allocation7 + $0x70] sm:$0xff]
    %v166 = vld [vmem:[#allocation7 + $0x78] sm:$0xff]
    %v167 = vld [vmem:[%s4] sm:$0x1]
    %v169 = vlaneseq
    %v170 = vshrl.u32 %v169, 7
    %v171 = vsub.s32 0, %v170
    %v172 = vrot.slane %v167, %v171
    %174 = vmatprep.subr.mxu0 0.0
    %175 = vmatpush1.msra.mxu0 %v151
    %176 = vmatprep.subr.mxu0 0.0
    %177 = vmatpush1.msra.mxu0 %v152
    %178 = vmatprep.subr.mxu0 0.0
    %179 = vmatpush1.msra.mxu0 %v153
    %180 = vmatprep.subr.mxu0 0.0
    %181 = vmatpush1.msra.mxu0 %v154
    %182 = vmatprep.subr.mxu0 0.0
    %183 = vmatpush1.msra.mxu0 %v155
    %184 = vmatprep.subr.mxu0 0.0
    %185 = vmatpush1.msra.mxu0 %v156
    %186 = vmatprep.subr.mxu0 0.0
    %187 = vmatpush1.msra.mxu0 %v157
    %188 = vmatprep.subr.mxu0 0.0
    %189 = vmatpush1.msra.mxu0 %v158
    %190 = vmatprep.subr.mxu0 0.0
    %191 = vmatpush1.msra.mxu0 %v159
    %192 = vmatprep.subr.mxu0 0.0
    %193 = vmatpush1.msra.mxu0 %v160
    %194 = vmatprep.subr.mxu0 0.0
    %195 = vmatpush1.msra.mxu0 %v161
    %196 = vmatprep.subr.mxu0 0.0
    %197 = vmatpush1.msra.mxu0 %v162
    %198 = vmatprep.subr.mxu0 0.0
    %199 = vmatpush1.msra.mxu0 %v163
    %200 = vmatprep.subr.mxu0 0.0
    %201 = vmatpush1.msra.mxu0 %v164
    %202 = vmatprep.subr.mxu0 0.0
    %203 = vmatpush1.msra.mxu0 %v165
    %204 = vmatprep.subr.mxu0 0.0
    %205 = vmatpush1.msra.mxu0 %v166
    %206 = vmatprep.subr.mxu0 0.0
    %207 = vmatpush1.msra.mxu0 0.0
    %208 = vmatprep.subr.mxu0 0.0
    %209 = vmatpush1.msra.mxu0 0.0
    %210 = vmatprep.subr.mxu0 0.0
    %211 = vmatpush1.msra.mxu0 0.0
    %212 = vmatprep.subr.mxu0 0.0
    %213 = vmatpush1.msra.mxu0 0.0
    %214 = vmatprep.subr.mxu0 0.0
    %215 = vmatpush1.msra.mxu0 0.0
    %216 = vmatprep.subr.mxu0 0.0
    %217 = vmatpush1.msra.mxu0 0.0
    %218 = vmatprep.subr.mxu0 0.0
    %219 = vmatpush1.msra.mxu0 0.0
    %220 = vmatprep.subr.mxu0 0.0
    %221 = vmatpush1.msra.mxu0 0.0
    %222 = vmatprep.subr.mxu0 0.0
    %223 = vmatpush1.msra.mxu0 0.0
    %224 = vmatprep.subr.mxu0 0.0
    %225 = vmatpush1.msra.mxu0 0.0
    %226 = vmatprep.subr.mxu0 0.0
    %227 = vmatpush1.msra.mxu0 0.0
    %228 = vmatprep.subr.mxu0 0.0
    %229 = vmatpush1.msra.mxu0 0.0
    %230 = vmatprep.subr.mxu0 0.0
    %231 = vmatpush1.msra.mxu0 0.0
    %232 = vmatprep.subr.mxu0 0.0
    %233 = vmatpush1.msra.mxu0 0.0
    %234 = vmatprep.subr.mxu0 0.0
    %235 = vmatpush1.msra.mxu0 0.0
    %236 = vmatprep.subr.mxu0 0.0
    %237 = vmatpush1.msra.mxu0 0.0
    %238 = vmatprep.mubr.f32.mxu0 0.0
    %239 = vmatmul.mubr.f32.gmra.mrb[0].mxu0 %v150
    %v240 = vpop.f32.mrb[0].mxu0
    %v241 = vadd.f32 %v172, %v240
    %v242 = vpop.f32.mrb[0].mxu0
    %243 = vdwg.mxu0
    %v244 = vmul.f32 %v241, %v241
    %vm245 = vcmask 1041408
    %v246 = vsel %vm245, %v244, 0.0
    %247 = vadd.xlane.f32.xlu0 %v246
    %v248 = vpop.xlane.xlu0 %247
    %v249 = vmax.f32 %v248, 1e-24
    %v250 = vrsqrt.pop %v249
    %v251 = vmul.f32 %v241, %v250
    %252 = vst [vmem:[#allocation8] sm:$0x3] %v251
    // Predicated region
    $region34: #{tpu_custom_call.1} parent=1 // pred_check
      _
    $region35: #{tpu_custom_call.1} parent=1 // pred_check_branch
      %254 = sbr.rel (0) target = $region37
    $region36: #{tpu_custom_call.1} parent=1 // pred_region
      %s256 = ssub.s32 32, 32
      %257 = vsyncadd [#allocation4], %s256
      %s259 = sshll.u32 [#allocation8], 4
      %s260 = int_to_ptr.vmem [resolvable:$true] %s259
      %262 = dma.vmem_to_hbm [thread:$0]  %s260, 32, %s5, [#allocation4]
    $region37: #{tpu_custom_call.1} parent=1 // pred_fallthru
      _
    // Predicated region
    $region38: #{tpu_custom_call.1} parent=1 // pred_check
      _
    $region39: #{tpu_custom_call.1} parent=1 // pred_check_branch
      %264 = sbr.rel (0) target = $region41
    $region40: #{tpu_custom_call.1} parent=1 // pred_region
      %265 = dma.done [#allocation4], 32
    $region41: #{tpu_custom_call.1} parent=1 // pred_fallthru
      _
    %266 = vsyncpa [#allocation3], 1
    %267 = vsyncpa [#allocation6], 1
    %268 = vsyncpa [#allocation4], 1

// kernel: tpu_custom_call.1
$region0: #{tpu_custom_call.1}
  #allocation0 [shape = 'u32[]', space=smem, size = 0x4, offset = 0x4, fixed_abs, tag = 'smem constant byte address 0x4 - core index']
  #allocation1 [shape = 'u32[144,128]{1,0:T(1,128)}', space=vmem, size = 0x12000, scoped, tag = 'internal scratch']
  %s0 = inlined_call_operand.hbm [shape: f32[2,64], index: 0, kind: input, shape index: {}]
  %s1 = inlined_call_operand.hbm [shape: f32[64,128], index: 1, kind: input, shape index: {}]
  %s2 = inlined_call_operand.vmem [shape: f32[1,128], index: 2, kind: input, shape index: {}]
  %s3 = inlined_call_operand.hbm [shape: f32[128,128], index: 3, kind: input, shape index: {}]
  %s4 = inlined_call_operand.vmem [shape: f32[1,128], index: 4, kind: input, shape index: {}]
  %s5 = inlined_call_operand.hbm [shape: f32[2,128], index: 5, kind: output, shape index: {}]
  %s6 = sld [smem:[#allocation0]]
  $region42: #{tpu_custom_call.1} parent=0
    _
  %s8 = ssub.s32 1, %s6
  %s9 = scalar_select 0, %s8, %s6
  $region1: #{tpu_custom_call.1} parent=0
    #allocation2 [shape = 'u8[1024]{0}', space=vmem, size = 0x400, scoped, tag = 'input window, operand 0, single buffered']
    #allocation3 [shape = 's32[1]{0}', space=sflag, size = 0x4, scoped, tag = 'scoped memory for tpu_custom_call.1']
    #allocation4 [shape = 's32[1]{0}', space=sflag, size = 0x4, scoped, tag = 'scoped memory for tpu_custom_call.1']
    #allocation5 [shape = 'u8[32768]{0}', space=vmem, size = 0x8000, scoped, tag = 'input window, operand 1, single buffered']
    #allocation6 [shape = 's32[1]{0}', space=sflag, size = 0x4, scoped, tag = 'scoped memory for tpu_custom_call.1']
    #allocation7 [shape = 'u8[65536]{0}', space=vmem, size = 0x10000, scoped, tag = 'input window, operand 3, single buffered']
    #allocation8 [shape = 'u8[1024]{0}', space=vmem, size = 0x400, scoped, tag = 'output window, operand 0, single buffered']
    %10 = vsyncpa [#allocation3], 0
    %11 = vsyncpa [#allocation6], 0
    %12 = vsyncpa [#allocation4], 0
    // Predicated region
    $region2: #{tpu_custom_call.1} parent=1 // pred_check
      _
    $region3: #{tpu_custom_call.1} parent=1 // pred_check_branch
      %14 = sbr.rel (0) target = $region5
    $region4: #{tpu_custom_call.1} parent=1 // pred_region
      %s16 = ssub.s32 32, 32
      %17 = vsyncadd [#allocation3], %s16
      %s19 = sshll.u32 [#allocation2], 4
      %s20 = int_to_ptr.vmem [resolvable:$true] %s19
      %22 = dma.hbm_to_vmem [thread:$0]  %s0, 32, %s20, [#allocation3]
    $region5: #{tpu_custom_call.1} parent=1 // pred_fallthru
      _
    // Predicated region
    $region6: #{tpu_custom_call.1} parent=1 // pred_check
      _
    $region7: #{tpu_custom_call.1} parent=1 // pred_check_branch
      %24 = sbr.rel (0) target = $region9
    $region8: #{tpu_custom_call.1} parent=1 // pred_region
      %s26 = ssub.s32 1024, 1024
      %27 = vsyncadd [#allocation6], %s26
      %s28 = sshll.u32 [#allocation5], 4
      %s29 = int_to_ptr.vmem [resolvable:$true] %s28
      %34 = dma.hbm_to_vmem [thread:$0]  %s1, 1024, %s29, [#allocation6], 128, 128, 8
    $region9: #{tpu_custom_call.1} parent=1 // pred_fallthru
      _
    // Predicated region
    $region10: #{tpu_custom_call.1} parent=1 // pred_check
      _
    $region11: #{tpu_custom_call.1} parent=1 // pred_check_branch
      %36 = sbr.rel (0) target = $region13
    $region12: #{tpu_custom_call.1} parent=1 // pred_region
      _
    $region13: #{tpu_custom_call.1} parent=1 // pred_fallthru
      _
    // Predicated region
    $region14: #{tpu_custom_call.1} parent=1 // pred_check
      _
    $region15: #{tpu_custom_call.1} parent=1 // pred_check_branch
      %38 = sbr.rel (0) target = $region17
    $region16: #{tpu_custom_call.1} parent=1 // pred_region
      %s40 = ssub.s32 2048, 2048
      %41 = vsyncadd [#allocation6], %s40
      %s42 = sshll.u32 [#allocation7], 4
      %s43 = int_to_ptr.vmem [resolvable:$true] %s42
      %48 = dma.hbm_to_vmem [thread:$0]  %s3, 2048, %s43, [#allocation6], 128, 128, 8
    $region17: #{tpu_custom_call.1} parent=1 // pred_fallthru
      _
    // Predicated region
    $region18: #{tpu_custom_call.1} parent=1 // pred_check
      _
    $region19: #{tpu_custom_call.1} parent=1 // pred_check_branch
      %50 = sbr.rel (0) target = $region21
    $region20: #{tpu_custom_call.1} parent=1 // pred_region
      _
    $region21: #{tpu_custom_call.1} parent=1 // pred_fallthru
      _
    // Predicated region
    $region22: #{tpu_custom_call.1} parent=1 // pred_check
      _
    $region23: #{tpu_custom_call.1} parent=1 // pred_check_branch
      %52 = sbr.rel (0) target = $region25
    $region24: #{tpu_custom_call.1} parent=1 // pred_region
      %53 = dma.done [#allocation3], 32
    $region25: #{tpu_custom_call.1} parent=1 // pred_fallthru
      _
    // Predicated region
    $region26: #{tpu_custom_call.1} parent=1 // pred_check
      _
    $region27: #{tpu_custom_call.1} parent=1 // pred_check_branch
      %55 = sbr.rel (0) target = $region29
    $region28: #{tpu_custom_call.1} parent=1 // pred_region
      %56 = dma.done [#allocation6], 1024
    $region29: #{tpu_custom_call.1} parent=1 // pred_fallthru
      _
    // Predicated region
    $region30: #{tpu_custom_call.1} parent=1 // pred_check
      _
    $region31: #{tpu_custom_call.1} parent=1 // pred_check_branch
      %58 = sbr.rel (0) target = $region33
    $region32: #{tpu_custom_call.1} parent=1 // pred_region
      %59 = dma.done [#allocation6], 2048
    $region33: #{tpu_custom_call.1} parent=1 // pred_fallthru
      _
    %v60 = vld [vmem:[#allocation2] sm:$0x3]
    %v61 = vld [vmem:[#allocation5] sm:$0xff]
    %v62 = vld [vmem:[#allocation5 + $0x8] sm:$0xff]
    %v63 = vld [vmem:[#allocation5 + $0x10] sm:$0xff]
    %v64 = vld [vmem:[#allocation5 + $0x18] sm:$0xff]
    %v65 = vld [vmem:[#allocation5 + $0x20] sm:$0xff]
    %v66 = vld [vmem:[#allocation5 + $0x28] sm:$0xff]
    %v67 = vld [vmem:[#allocation5 + $0x30] sm:$0xff]
    %v68 = vld [vmem:[#allocation5 + $0x38] sm:$0xff]
    %v69 = vld [vmem:[%s2] sm:$0x1]
    %v71 = vlaneseq
    %v72 = vshrl.u32 %v71, 7
    %v73 = vsub.s32 0, %v72
    %v74 = vrot.slane %v69, %v73
    %vm76 = vcmask 523264
    %v78 = vsel %vm76, %v60, 0
    %80 = vmatprep.subr.mxu0 0.0
    %81 = vmatpush1.msra.mxu0 %v61
    %82 = vmatprep.subr.mxu0 0.0
    %83 = vmatpush1.msra.mxu0 %v62
    %84 = vmatprep.subr.mxu0 0.0
    %85 = vmatpush1.msra.mxu0 %v63
    %86 = vmatprep.subr.mxu0 0.0
    %87 = vmatpush1.msra.mxu0 %v64
    %88 = vmatprep.subr.mxu0 0.0
    %89 = vmatpush1.msra.mxu0 %v65
    %90 = vmatprep.subr.mxu0 0.0
    %91 = vmatpush1.msra.mxu0 %v66
    %92 = vmatprep.subr.mxu0 0.0
    %93 = vmatpush1.msra.mxu0 %v67
    %94 = vmatprep.subr.mxu0 0.0
    %95 = vmatpush1.msra.mxu0 %v68
    %96 = vmatprep.subr.mxu0 0.0
    %97 = vmatpush1.msra.mxu0 0.0
    %98 = vmatprep.subr.mxu0 0.0
    %99 = vmatpush1.msra.mxu0 0.0
    %100 = vmatprep.subr.mxu0 0.0
    %101 = vmatpush1.msra.mxu0 0.0
    %102 = vmatprep.subr.mxu0 0.0
    %103 = vmatpush1.msra.mxu0 0.0
    %104 = vmatprep.subr.mxu0 0.0
    %105 = vmatpush1.msra.mxu0 0.0
    %106 = vmatprep.subr.mxu0 0.0
    %107 = vmatpush1.msra.mxu0 0.0
    %108 = vmatprep.subr.mxu0 0.0
    %109 = vmatpush1.msra.mxu0 0.0
    %110 = vmatprep.subr.mxu0 0.0
    %111 = vmatpush1.msra.mxu0 0.0
    %112 = vmatprep.subr.mxu0 0.0
    %113 = vmatpush1.msra.mxu0 0.0
    %114 = vmatprep.subr.mxu0 0.0
    %115 = vmatpush1.msra.mxu0 0.0
    %116 = vmatprep.subr.mxu0 0.0
    %117 = vmatpush1.msra.mxu0 0.0
    %118 = vmatprep.subr.mxu0 0.0
    %119 = vmatpush1.msra.mxu0 0.0
    %120 = vmatprep.subr.mxu0 0.0
    %121 = vmatpush1.msra.mxu0 0.0
    %122 = vmatprep.subr.mxu0 0.0
    %123 = vmatpush1.msra.mxu0 0.0
    %124 = vmatprep.subr.mxu0 0.0
    %125 = vmatpush1.msra.mxu0 0.0
    %126 = vmatprep.subr.mxu0 0.0
    %127 = vmatpush1.msra.mxu0 0.0
    %128 = vmatprep.subr.mxu0 0.0
    %129 = vmatpush1.msra.mxu0 0.0
    %130 = vmatprep.subr.mxu0 0.0
    %131 = vmatpush1.msra.mxu0 0.0
    %132 = vmatprep.subr.mxu0 0.0
    %133 = vmatpush1.msra.mxu0 0.0
    %134 = vmatprep.subr.mxu0 0.0
    %135 = vmatpush1.msra.mxu0 0.0
    %136 = vmatprep.subr.mxu0 0.0
    %137 = vmatpush1.msra.mxu0 0.0
    %138 = vmatprep.subr.mxu0 0.0
    %139 = vmatpush1.msra.mxu0 0.0
    %140 = vmatprep.subr.mxu0 0.0
    %141 = vmatpush1.msra.mxu0 0.0
    %142 = vmatprep.subr.mxu0 0.0
    %143 = vmatpush1.msra.mxu0 0.0
    %144 = vmatprep.mubr.f32.mxu0 0.0
    %145 = vmatmul.mubr.f32.gmra.mrb[0].mxu0 %v78
    %v146 = vpop.f32.mrb[0].mxu0
    %v147 = vadd.f32 %v74, %v146
    %v148 = vpop.f32.mrb[0].mxu0
    %149 = vdwg.mxu0
    %v150 = vtanh.pop %v147
    %v151 = vld [vmem:[#allocation7] sm:$0xff]
    %v152 = vld [vmem:[#allocation7 + $0x8] sm:$0xff]
    %v153 = vld [vmem:[#allocation7 + $0x10] sm:$0xff]
    %v154 = vld [vmem:[#allocation7 + $0x18] sm:$0xff]
    %v155 = vld [vmem:[#allocation7 + $0x20] sm:$0xff]
    %v156 = vld [vmem:[#allocation7 + $0x28] sm:$0xff]
    %v157 = vld [vmem:[#allocation7 + $0x30] sm:$0xff]
    %v158 = vld [vmem:[#allocation7 + $0x38] sm:$0xff]
    %v159 = vld [vmem:[#allocation7 + $0x40] sm:$0xff]
    %v160 = vld [vmem:[#allocation7 + $0x48] sm:$0xff]
    %v161 = vld [vmem:[#allocation7 + $0x50] sm:$0xff]
    %v162 = vld [vmem:[#allocation7 + $0x58] sm:$0xff]
    %v163 = vld [vmem:[#allocation7 + $0x60] sm:$0xff]
    %v164 = vld [vmem:[#allocation7 + $0x68] sm:$0xff]
    %v165 = vld [vmem:[#allocation7 + $0x70] sm:$0xff]
    %v166 = vld [vmem:[#allocation7 + $0x78] sm:$0xff]
    %v167 = vld [vmem:[%s4] sm:$0x1]
    %v169 = vlaneseq
    %v170 = vshrl.u32 %v169, 7
    %v171 = vsub.s32 0, %v170
    %v172 = vrot.slane %v167, %v171
    %174 = vmatprep.subr.mxu0 0.0
    %175 = vmatpush1.msra.mxu0 %v151
    %176 = vmatprep.subr.mxu0 0.0
    %177 = vmatpush1.msra.mxu0 %v152
    %178 = vmatprep.subr.mxu0 0.0
    %179 = vmatpush1.msra.mxu0 %v153
    %180 = vmatprep.subr.mxu0 0.0
    %181 = vmatpush1.msra.mxu0 %v154
    %182 = vmatprep.subr.mxu0 0.0
    %183 = vmatpush1.msra.mxu0 %v155
    %184 = vmatprep.subr.mxu0 0.0
    %185 = vmatpush1.msra.mxu0 %v156
    %186 = vmatprep.subr.mxu0 0.0
    %187 = vmatpush1.msra.mxu0 %v157
    %188 = vmatprep.subr.mxu0 0.0
    %189 = vmatpush1.msra.mxu0 %v158
    %190 = vmatprep.subr.mxu0 0.0
    %191 = vmatpush1.msra.mxu0 %v159
    %192 = vmatprep.subr.mxu0 0.0
    %193 = vmatpush1.msra.mxu0 %v160
    %194 = vmatprep.subr.mxu0 0.0
    %195 = vmatpush1.msra.mxu0 %v161
    %196 = vmatprep.subr.mxu0 0.0
    %197 = vmatpush1.msra.mxu0 %v162
    %198 = vmatprep.subr.mxu0 0.0
    %199 = vmatpush1.msra.mxu0 %v163
    %200 = vmatprep.subr.mxu0 0.0
    %201 = vmatpush1.msra.mxu0 %v164
    %202 = vmatprep.subr.mxu0 0.0
    %203 = vmatpush1.msra.mxu0 %v165
    %204 = vmatprep.subr.mxu0 0.0
    %205 = vmatpush1.msra.mxu0 %v166
    %206 = vmatprep.subr.mxu0 0.0
    %207 = vmatpush1.msra.mxu0 0.0
    %208 = vmatprep.subr.mxu0 0.0
    %209 = vmatpush1.msra.mxu0 0.0
    %210 = vmatprep.subr.mxu0 0.0
    %211 = vmatpush1.msra.mxu0 0.0
    %212 = vmatprep.subr.mxu0 0.0
    %213 = vmatpush1.msra.mxu0 0.0
    %214 = vmatprep.subr.mxu0 0.0
    %215 = vmatpush1.msra.mxu0 0.0
    %216 = vmatprep.subr.mxu0 0.0
    %217 = vmatpush1.msra.mxu0 0.0
    %218 = vmatprep.subr.mxu0 0.0
    %219 = vmatpush1.msra.mxu0 0.0
    %220 = vmatprep.subr.mxu0 0.0
    %221 = vmatpush1.msra.mxu0 0.0
    %222 = vmatprep.subr.mxu0 0.0
    %223 = vmatpush1.msra.mxu0 0.0
    %224 = vmatprep.subr.mxu0 0.0
    %225 = vmatpush1.msra.mxu0 0.0
    %226 = vmatprep.subr.mxu0 0.0
    %227 = vmatpush1.msra.mxu0 0.0
    %228 = vmatprep.subr.mxu0 0.0
    %229 = vmatpush1.msra.mxu0 0.0
    %230 = vmatprep.subr.mxu0 0.0
    %231 = vmatpush1.msra.mxu0 0.0
    %232 = vmatprep.subr.mxu0 0.0
    %233 = vmatpush1.msra.mxu0 0.0
    %234 = vmatprep.subr.mxu0 0.0
    %235 = vmatpush1.msra.mxu0 0.0
    %236 = vmatprep.subr.mxu0 0.0
    %237 = vmatpush1.msra.mxu0 0.0
    %238 = vmatprep.mubr.f32.mxu0 0.0
    %239 = vmatmul.mubr.f32.gmra.mrb[0].mxu0 %v150
    %v240 = vpop.f32.mrb[0].mxu0
    %v241 = vadd.f32 %v172, %v240
    %v242 = vpop.f32.mrb[0].mxu0
    %243 = vdwg.mxu0
    %v244 = vmul.f32 %v241, %v241
    %vm245 = vcmask 1041408
    %v246 = vsel %vm245, %v244, 0.0
    %247 = vadd.xlane.f32.xlu0 %v246
    %v248 = vpop.xlane.xlu0 %247
    %v249 = vmax.f32 %v248, 1e-24
    %v250 = vrsqrt.pop %v249
    %v251 = vmul.f32 %v241, %v250
    %252 = vst [vmem:[#allocation8] sm:$0x3] %v251
    // Predicated region
    $region34: #{tpu_custom_call.1} parent=1 // pred_check
      _
    $region35: #{tpu_custom_call.1} parent=1 // pred_check_branch
      %254 = sbr.rel (0) target = $region37
    $region36: #{tpu_custom_call.1} parent=1 // pred_region
      %s256 = ssub.s32 32, 32
      %257 = vsyncadd [#allocation4], %s256
      %s259 = sshll.u32 [#allocation8], 4
      %s260 = int_to_ptr.vmem [resolvable:$true] %s259
      %262 = dma.vmem_to_hbm [thread:$0]  %s260, 32, %s5, [#allocation4]
    $region37: #{tpu_custom_call.1} parent=1 // pred_fallthru
      _
    // Predicated region
    $region38: #{tpu_custom_call.1} parent=1 // pred_check
      _
    $region39: #{tpu_custom_call.1} parent=1 // pred_check_branch
      %264 = sbr.rel (0) target = $region41
    $region40: #{tpu_custom_call.1} parent=1 // pred_region
      %265 = dma.done [#allocation4], 32
    $region41: #{tpu_custom_call.1} parent=1 // pred_fallthru
      _
    %266 = vsyncpa [#allocation3], 1
    %267 = vsyncpa [#allocation6], 1
    %268 = vsyncpa [#allocation4], 1

</llo_original>
